<compile_context>
chip_gen: v5e
topology: v5e:2x2
jax: 0.10.0
libtpu: 0.0.40
codegen_flags: <defaults>
</compile_context>

<pallas_src>
import itertools
import numpy as np

import jax
import jax.numpy as jnp
from jax import lax
from jax.experimental import pallas as pl
from jax.experimental.pallas import tpu as pltpu

NUM_CLASS = 18
C1 = NUM_CLASS + 1
COST_WEIGHT = (1.0, 1.0, 1.0)
LOSS_WEIGHT = (1.0, 1.0, 1.0, 1.0)
NON_OBJECT_WEIGHT = 0.1
NEG_PAD = -1.0e4          # pad value for mask logits: softplus/sigmoid/bce -> exactly 0

_DN = (((1,), (1,)), ((), ()))  # 'nc,mc->nm' contraction


def _round_up(x, m):
    return ((x + m - 1) // m) * m


# ----------------------------------------------------------------------------
# Kernel 1: batched matcher cost tensor, N-tiled with VMEM accumulators
#   C[b] = w0*cost_class + w1*cost_bce + w2*cost_dice     shape (n_q, M_max)
# ----------------------------------------------------------------------------
def _cost_kernel(npts_ref, label_ref, onehot_ref, mask_ref, tgt_ref, c_ref,
                 acc_xt, acc_neg, acc_sig, acc_sigt, acc_tsum):
    b = pl.program_id(0)
    n_idx = pl.program_id(1)
    n_last = pl.num_programs(1) - 1

    @pl.when(n_idx == 0)
    def _init():
        for r in (acc_xt, acc_neg, acc_sig, acc_sigt, acc_tsum):
            r[...] = jnp.zeros_like(r)

    x = mask_ref[0]                      # (n_q, TN) mask logits (padded pts = NEG_PAD)
    t = tgt_ref[0]                       # (M_max, TN) binary targets (padded = 0)

    # shared exp: softplus(x) and sigmoid(x) both derived from e = exp(-|x|)
    e = jnp.exp(-jnp.abs(x))
    neg = jnp.maximum(x, 0.0) + jnp.log1p(e)                 # bce(x, 0) == softplus(x)
    sig = jnp.where(x >= 0.0, 1.0 / (1.0 + e), e / (1.0 + e))

    # Fused BCE cost:  pos - neg == -x  =>  dot(pos,t)+dot(neg,1-t) = dot(-x,t)+rowsum(neg)
    t_bf = t.astype(jnp.bfloat16)
    acc_xt[...] += lax.dot_general((-x).astype(jnp.bfloat16), t_bf, _DN,
                                   preferred_element_type=jnp.float32)
    acc_sigt[...] += lax.dot_general(sig.astype(jnp.bfloat16), t_bf, _DN,
                                     preferred_element_type=jnp.float32)
    ones = jnp.ones((1, t.shape[-1]), jnp.bfloat16)
    acc_tsum[...] += lax.dot_general(ones, t_bf, _DN,
                                     preferred_element_type=jnp.float32)  # (1, M_max)
    acc_neg[...] += jnp.sum(neg, axis=-1, keepdims=True)
    acc_sig[...] += jnp.sum(sig, axis=-1, keepdims=True)

    @pl.when(n_idx == n_last)
    def _fin():
        n_pts = npts_ref[b].astype(jnp.float32)              # true point count

        # classification cost, computed once per batch (not per N tile)
        z = label_ref[0]
        z = z - jnp.max(z, axis=-1, keepdims=True)
        ez = jnp.exp(z)
        sm = ez / jnp.sum(ez, axis=-1, keepdims=True)
        cost_class = -lax.dot_general(sm, onehot_ref[0], _DN,
                                      preferred_element_type=jnp.float32)

        cost_mask = (acc_xt[...] + acc_neg[...]) / n_pts
        cost_dice = 1.0 - (2.0 * acc_sigt[...] + 1.0) / (acc_sig[...] + acc_tsum[...] + 1.0)

        c_ref[0] = (COST_WEIGHT[0] * cost_class
                    + COST_WEIGHT[1] * cost_mask
                    + COST_WEIGHT[2] * cost_dice)


def batched_cost_call(npts, labels, onehot, masks, tgts, tn):
    B, n_q, c1 = labels.shape
    m_max = tgts.shape[1]
    n_pad = masks.shape[2]
    n_tiles = n_pad // tn
    return pl.pallas_call(
        _cost_kernel,
        out_shape=jax.ShapeDtypeStruct((B, n_q, m_max), jnp.float32),
        grid_spec=pltpu.PrefetchScalarGridSpec(
            num_scalar_prefetch=1,
            grid=(B, n_tiles),
            in_specs=[
                pl.BlockSpec((1, n_q, c1), lambda b, n, p: (b, 0, 0)),
                pl.BlockSpec((1, m_max, c1), lambda b, n, p: (b, 0, 0)),
                pl.BlockSpec((1, n_q, tn), lambda b, n, p: (b, 0, n)),
                pl.BlockSpec((1, m_max, tn), lambda b, n, p: (b, 0, n)),
            ],
            out_specs=pl.BlockSpec((1, n_q, m_max), lambda b, n, p: (b, 0, 0)),
            scratch_shapes=[
                pltpu.VMEM((n_q, m_max), jnp.float32),
                pltpu.VMEM((n_q, 1), jnp.float32),
                pltpu.VMEM((n_q, 1), jnp.float32),
                pltpu.VMEM((n_q, m_max), jnp.float32),
                pltpu.VMEM((1, m_max), jnp.float32),
            ],
        ),
        compiler_params=pltpu.CompilerParams(
            dimension_semantics=("parallel", "arbitrary"),
            vmem_limit_bytes=32 * 1024 * 1024),
    )(npts, labels, onehot, masks, tgts)


# ----------------------------------------------------------------------------
# Kernel 2: batched per-sample losses (weighted CE partials + matched BCE /
#           dice / IoU-filtered-MSE), packed into one (1, 8) lane vector per batch.
#   out[b] = [wnll_sum, w_sum, bce_mean, dice_mean, mse_sum, keep_cnt, 0, 0]
# ----------------------------------------------------------------------------
def _loss_kernel(kcnt_ref, npts_ref, logit_ref, onehot_ref, rw_ref,
                 pm_ref, tm_ref, ps_ref, out_ref,
                 acc_bce, acc_num, acc_sig, acc_t, acc_int, acc_bx, acc_bt):
    b = pl.program_id(0)
    n_idx = pl.program_id(1)
    n_last = pl.num_programs(1) - 1

    @pl.when(n_idx == 0)
    def _init():
        for r in (acc_bce, acc_num, acc_sig, acc_t, acc_int, acc_bx, acc_bt):
            r[...] = jnp.zeros_like(r)

    x = pm_ref[0]                        # (K_max, TN) matched mask logits
    t = tm_ref[0]                        # (K_max, TN) matched binary targets
    k_valid = kcnt_ref[b]
    row_ids = lax.broadcasted_iota(jnp.int32, (x.shape[0], 1), 0)
    row_ok = (row_ids < k_valid).astype(jnp.float32)         # (K_max, 1)

    e = jnp.exp(-jnp.abs(x))                                 # shared exp
    sp = jnp.log1p(e)
    sig = jnp.where(x >= 0.0, 1.0 / (1.0 + e), e / (1.0 + e))
    bce = jnp.maximum(x, 0.0) - x * t + sp

    acc_bce[...] += jnp.sum(row_ok * jnp.sum(bce, axis=-1, keepdims=True), keepdims=True)
    acc_num[...] += jnp.sum(sig * t, axis=-1, keepdims=True)
    acc_sig[...] += jnp.sum(sig, axis=-1, keepdims=True)
    acc_t[...] += jnp.sum(t, axis=-1, keepdims=True)
    bx = (x >= 0.0).astype(jnp.float32)                      # sigmoid(x) >= 0.5
    bt = (t > 0.5).astype(jnp.float32)
    acc_int[...] += jnp.sum(bx * bt, axis=-1, keepdims=True)
    acc_bx[...] += jnp.sum(bx, axis=-1, keepdims=True)
    acc_bt[...] += jnp.sum(bt, axis=-1, keepdims=True)

    @pl.when(n_idx == n_last)
    def _fin():
        k = jnp.maximum(k_valid.astype(jnp.float32), 1.0)
        n_pts = npts_ref[b].astype(jnp.float32)

        # weighted cross-entropy partials (computed once per batch)
        z = logit_ref[0]                                     # (n_q, C1)
        m = jnp.max(z, axis=-1, keepdims=True)
        lse = jnp.log(jnp.sum(jnp.exp(z - m), axis=-1, keepdims=True)) + m
        nll = -jnp.sum(onehot_ref[0] * (z - lse), axis=-1, keepdims=True)
        w = rw_ref[0]                                        # (n_q, 1)
        wnll_sum = jnp.sum(w * nll, keepdims=True)           # (1, 1)
        w_sum = jnp.sum(w, keepdims=True)

        bce_mean = acc_bce[...] / (k * n_pts)

        dice_rows = 1.0 - (2.0 * acc_num[...] + 1.0) / (acc_sig[...] + acc_t[...] + 1.0)
        dice_mean = jnp.sum(row_ok * dice_rows, keepdims=True) / k

        iou = acc_int[...] / (acc_bt[...] + acc_bx[...] - acc_int[...] + 1e-6)
        keep = jnp.logical_and(iou > 0.5, row_ok > 0.5).astype(jnp.float32)
        se = (ps_ref[0] - iou) ** 2
        mse_sum = jnp.sum(keep * se, keepdims=True)
        cnt = jnp.sum(keep, keepdims=True)

        lane = lax.broadcasted_iota(jnp.int32, (1, 8), 1)
        packed = (jnp.where(lane == 0, wnll_sum, 0.0)
                  + jnp.where(lane == 1, w_sum, 0.0)
                  + jnp.where(lane == 2, bce_mean, 0.0)
                  + jnp.where(lane == 3, dice_mean, 0.0)
                  + jnp.where(lane == 4, mse_sum, 0.0)
                  + jnp.where(lane == 5, cnt, 0.0))
        out_ref[0] = packed


def batched_loss_call(kcnt, npts, logits, onehot, row_w, pm, tm, ps, tn):
    B, n_q, c1 = logits.shape
    k_max = pm.shape[1]
    n_pad = pm.shape[2]
    n_tiles = n_pad // tn
    return pl.pallas_call(
        _loss_kernel,
        out_shape=jax.ShapeDtypeStruct((B, 1, 8), jnp.float32),
        grid_spec=pltpu.PrefetchScalarGridSpec(
            num_scalar_prefetch=2,
            grid=(B, n_tiles),
            in_specs=[
                pl.BlockSpec((1, n_q, c1), lambda b, n, k, p: (b, 0, 0)),
                pl.BlockSpec((1, n_q, c1), lambda b, n, k, p: (b, 0, 0)),
                pl.BlockSpec((1, n_q, 1), lambda b, n, k, p: (b, 0, 0)),
                pl.BlockSpec((1, k_max, tn), lambda b, n, k, p: (b, 0, n)),
                pl.BlockSpec((1, k_max, tn), lambda b, n, k, p: (b, 0, n)),
                pl.BlockSpec((1, k_max, 1), lambda b, n, k, p: (b, 0, 0)),
            ],
            out_specs=pl.BlockSpec((1, 1, 8), lambda b, n, k, p: (b, 0, 0)),
            scratch_shapes=[pltpu.VMEM((1, 1), jnp.float32)]
                           + [pltpu.VMEM((k_max, 1), jnp.float32)] * 6,
        ),
        compiler_params=pltpu.CompilerParams(
            dimension_semantics=("parallel", "arbitrary"),
            vmem_limit_bytes=32 * 1024 * 1024),
    )(kcnt, npts, logits, onehot, row_w, pm, tm, ps)


# ----------------------------------------------------------------------------
# Host-side exact min-cost assignment (replaces scipy.linear_sum_assignment)
# ----------------------------------------------------------------------------
def _min_cost_assignment(cost):
    n, m = cost.shape
    best_rows, best_cost = None, np.inf
    for perm in itertools.permutations(range(n), m):
        c = sum(cost[perm[j], j] for j in range(m))
        if c < best_cost:
            best_cost, best_rows = c, perm
    rows = np.asarray(best_rows, dtype=np.int64)
    cols = np.arange(m, dtype=np.int64)
    order = np.argsort(rows)
    return rows[order], cols[order]


# ----------------------------------------------------------------------------
# Criterion (forward only)
# ----------------------------------------------------------------------------
class CriterionPallas:
    def __init__(self, num_class=NUM_CLASS, non_object_weight=NON_OBJECT_WEIGHT,
                 loss_weight=LOSS_WEIGHT, ignore_label=-100, point_tile=None):
        self.num_class = num_class
        self.ignore_label = ignore_label
        self.class_weight = jnp.ones((num_class + 1,), jnp.float32).at[-1].set(non_object_weight)
        self.loss_weight = loss_weight
        if point_tile is not None:
            assert point_tile % 128 == 0, "point_tile must be a multiple of 128 lanes"
        # v7x VMEM is 64 MiB physical / 32 MiB scoped: the default 2048-col tile with
        # double-buffered bf16/f32 operands stays well inside that budget.
        self.point_tile = point_tile

    # ---- padding / stacking of ragged per-batch inputs -----------------------
    def _pad_inputs(self, pred_masks, insts):
        B = len(pred_masks)
        n_pts_list = [int(m.shape[1]) for m in pred_masks]
        m_list = [int(inst['gt_labels'].shape[0]) for inst in insts]
        m_max = max(8, _round_up(max(m_list + [1]), 8))
        n_max = max(n_pts_list)
        tn = self.point_tile if self.point_tile is not None else min(2048, _round_up(n_max, 128))
        n_pad = _round_up(n_max, tn)

        pm_full = jnp.stack([
            jnp.pad(pred_masks[b].astype(jnp.float32),
                    ((0, 0), (0, n_pad - n_pts_list[b])),
                    constant_values=NEG_PAD)
            for b in range(B)])                                    # (B, n_q, N_pad)
        tgt_full = jnp.stack([
            jnp.pad(insts[b]['gt_spmasks'].astype(jnp.float32),
                    ((0, m_max - m_list[b]), (0, n_pad - n_pts_list[b])))
            for b in range(B)])                                    # (B, M_max, N_pad)
        onehot_tgt = jnp.stack([
            jnp.pad(jax.nn.one_hot(insts[b]['gt_labels'], C1, dtype=jnp.float32),
                    ((0, m_max - m_list[b]), (0, 0)))
            for b in range(B)])                                    # (B, M_max, C1)
        npts = jnp.asarray(n_pts_list, jnp.int32)
        return pm_full, tgt_full, onehot_tgt, npts, m_list, tn

    # ---- matching: one batched cost kernel + ONE host round-trip -------------
    def _match_padded(self, pred_labels, pm_full, tgt_full, onehot_tgt, npts, m_list, tn):
        B = pm_full.shape[0]
        empty = (np.zeros((0,), np.int64), np.zeros((0,), np.int64))
        if max(m_list) == 0:
            return [empty for _ in range(B)]
        cost = batched_cost_call(npts, pred_labels, onehot_tgt, pm_full, tgt_full, tn)
        cost_np = np.asarray(jax.device_get(cost))                 # single host sync
        indices = []
        for b in range(B):
            m = m_list[b]
            if m == 0:
                indices.append(empty)
            else:
                indices.append(_min_cost_assignment(cost_np[b, :, :m]))
        return indices

    def match(self, pred_labels, pred_masks, insts):
        pm_full, tgt_full, onehot_tgt, npts, m_list, tn = self._pad_inputs(pred_masks, insts)
        return self._match_padded(pred_labels.astype(jnp.float32), pm_full, tgt_full,
                                  onehot_tgt, npts, m_list, tn)

    # ---- one decoder layer's loss --------------------------------------------
    def _layer_loss(self, pred_labels, pred_scores, pred_masks, insts, dice_div_by_batch):
        if isinstance(pred_scores, (list, tuple)):
            pred_scores = jnp.stack(list(pred_scores))
        pred_labels = pred_labels.astype(jnp.float32)
        B, n_q, c1 = pred_labels.shape

        pm_full, tgt_full, onehot_tgt, npts, m_list, tn = self._pad_inputs(pred_masks, insts)
        indices = self._match_padded(pred_labels, pm_full, tgt_full, onehot_tgt,
                                     npts, m_list, tn)

        k_max = tgt_full.shape[1]
        iq_pad = np.zeros((B, k_max), np.int32)
        ig_pad = np.zeros((B, k_max), np.int32)
        kcnt = np.zeros((B,), np.int32)
        tgt_class = np.full((B, n_q), self.num_class, np.int32)
        labels_host = jax.device_get([inst['gt_labels'] for inst in insts])
        for b, (iq, ig) in enumerate(indices):
            k = len(iq)
            kcnt[b] = k
            if k:
                iq_pad[b, :k] = iq
                ig_pad[b, :k] = ig
                tgt_class[b, iq] = np.asarray(labels_host[b])[ig]

        iq_j = jnp.asarray(iq_pad)
        ig_j = jnp.asarray(ig_pad)
        pm_m = jnp.take_along_axis(pm_full, iq_j[:, :, None], axis=1)           # (B,K,N_pad)
        tm_m = jnp.take_along_axis(tgt_full, ig_j[:, :, None], axis=1)          # (B,K,N_pad)
        ps_m = jnp.take_along_axis(pred_scores.astype(jnp.float32),
                                   iq_j[:, :, None], axis=1)                    # (B,K,1)

        tgt_class_j = jnp.asarray(tgt_class)
        onehot_cls = jax.nn.one_hot(tgt_class_j, c1, dtype=jnp.float32)
        row_w = self.class_weight[tgt_class_j][..., None]

        res = batched_loss_call(jnp.asarray(kcnt), npts, pred_labels, onehot_cls, row_w,
                                pm_m, tm_m, ps_m, tn)[:, 0, :]                   # (B, 8)

        class_loss = jnp.sum(res[:, 0]) / jnp.sum(res[:, 1])
        mask_bce_loss = jnp.sum(res[:, 2]) / B
        # NOTE: forward() in the original does NOT divide mask_dice_loss by the batch
        # size (only get_layer_loss does); the quirk is reproduced via the flag.
        mask_dice_loss = jnp.sum(res[:, 3])
        if dice_div_by_batch:
            mask_dice_loss = mask_dice_loss / B
        score_loss = jnp.sum(jnp.where(res[:, 5] > 0.0,
                                       res[:, 4] / jnp.maximum(res[:, 5], 1.0), 0.0)) / B

        lw = self.loss_weight
        loss = (lw[0] * class_loss + lw[1] * mask_bce_loss
                + lw[2] * mask_dice_loss + lw[3] * score_loss)
        return loss, (class_loss, score_loss, mask_bce_loss, mask_dice_loss)

    def forward(self, pred, insts):
        loss, parts = self._layer_loss(pred['labels'], pred['scores'], pred['masks'],
                                       insts, dice_div_by_batch=False)
        out = {'cls_loss': parts[0], 'score_loss': parts[1],
               'mask_bce_loss': parts[2], 'mask_dice_loss': parts[3]}
        if 'aux_outputs' in pred:
            for i, aux in enumerate(pred['aux_outputs']):
                loss_i, parts_i = self._layer_loss(aux['labels'], aux['scores'], aux['masks'],
                                                   insts, dice_div_by_batch=True)
                loss = loss + loss_i
                out.update({f'layer_{i}_cls_loss': parts_i[0],
                            f'layer_{i}_score_loss': parts_i[1],
                            f'layer_{i}_mask_bce_loss': parts_i[2],
                            f'layer_{i}_mask_dice_loss': parts_i[3]})
        out['loss'] = loss
        out_host = jax.device_get(out)                 # one host sync for the log dict
        loss_out = {k: float(v) for k, v in out_host.items()}
        return loss, loss_out


# ----------------------------------------------------------------------------
# Pure-JAX reference (same matching indices) used as a sanity check
# ----------------------------------------------------------------------------
def _ref_loss(pred, insts, indices, class_weight, loss_weight):
    pred_labels = pred['labels']
    pred_scores = pred['scores']
    pred_masks = pred['masks']
    B, n_q, _ = pred_labels.shape
    tgt_class = np.full((B, n_q), NUM_CLASS, np.int32)
    for b, (iq, ig) in enumerate(indices):
        if len(iq):
            tgt_class[b, iq] = np.asarray(jax.device_get(insts[b]['gt_labels']))[ig]
    tc = jnp.asarray(tgt_class)
    logsm = jax.nn.log_softmax(pred_labels.astype(jnp.float32), axis=-1)
    nll = -jnp.take_along_axis(logsm, tc[..., None], axis=-1)[..., 0]
    w = class_weight[tc]
    class_loss = jnp.sum(w * nll) / jnp.sum(w)

    score_loss = mask_bce = mask_dice = jnp.float32(0.0)
    for b, (iq, ig) in enumerate(indices):
        if len(iq) == 0:
            continue
        x = pred_masks[b].astype(jnp.float32)[jnp.asarray(iq)]
        t = insts[b]['gt_spmasks'].astype(jnp.float32)[jnp.asarray(ig)]
        ps = pred_scores[b].astype(jnp.float32)[jnp.asarray(iq)]
        bce = jnp.maximum(x, 0.0) - x * t + jnp.log1p(jnp.exp(-jnp.abs(x)))
        mask_bce = mask_bce + jnp.mean(bce)
        sig = jax.nn.sigmoid(x)
        dice = 1.0 - (2.0 * jnp.sum(sig * t, -1) + 1.0) / (jnp.sum(sig, -1) + jnp.sum(t, -1) + 1.0)
        mask_dice = mask_dice + jnp.mean(dice)
        bx = (sig >= 0.5).astype(jnp.float32)
        bt = (t > 0.5).astype(jnp.float32)
        inter = jnp.sum(bx * bt, -1)
        iou = inter / (jnp.sum(bt, -1) + jnp.sum(bx, -1) - inter + 1e-6)
        keep = iou > 0.5
        cnt = jnp.sum(keep.astype(jnp.float32))
        mse = jnp.sum(jnp.where(keep, (ps[:, 0] - iou) ** 2, 0.0)) / jnp.maximum(cnt, 1.0)
        score_loss = score_loss + jnp.where(cnt > 0, mse, 0.0)
    score_loss = score_loss / len(pred_masks)
    mask_bce = mask_bce / len(pred_masks)
    lw = loss_weight
    return lw[0] * class_loss + lw[1] * mask_bce + lw[2] * mask_dice + lw[3] * score_loss


if __name__ == "__main__":
    key = jax.random.PRNGKey(0)
    B, n_q = 2, 8
    n_pts_list = [384, 320]          # ragged point counts: exercises N padding + tiling
    ks = jax.random.split(key, 8)

    pred_labels = jax.random.normal(ks[0], (B, n_q, C1), jnp.float32)
    pred_scores = jax.random.uniform(ks[1], (B, n_q, 1), jnp.float32)
    pred_masks = [jax.random.normal(ks[2 + b], (n_q, n_pts_list[b]), jnp.float32) * 2.0
                  for b in range(B)]

    num_inst = [3, 2]
    insts = []
    for b in range(B):
        labels = jax.random.randint(ks[4 + b], (num_inst[b],), 0, NUM_CLASS)
        spmasks = (jax.random.uniform(ks[6 + b], (num_inst[b], n_pts_list[b])) > 0.6
                   ).astype(jnp.float32)
        insts.append({'gt_labels': labels, 'gt_spmasks': spmasks})

    pred = {'labels': pred_labels, 'scores': pred_scores, 'masks': pred_masks}

    # small point tile so the N-tiled accumulator pipeline runs with >1 grid step
    criterion = CriterionPallas(point_tile=128)
    loss, loss_out = criterion.forward(pred, insts)
    loss = jax.block_until_ready(loss)

    # sanity check against a pure-JAX reference using the same matching indices
    indices = criterion.match(pred_labels, pred_masks, insts)
    ref = jax.block_until_ready(_ref_loss(pred, insts, indices,
                                          criterion.class_weight, LOSS_WEIGHT))
    assert np.allclose(np.asarray(loss), np.asarray(ref), rtol=1e-3, atol=1e-3), \
        (float(loss), float(ref))

    print("KERNEL_OK")
</pallas_src>

<mosaic_0001>
module attributes {stable_mosaic.version = 11 : i64} {
  func.func @_cost_kernel(%arg0: i32, %arg1: i32, %arg2: memref<2xi32, #tpu.memory_space<smem>>, %arg3: memref<1x8x19xf32, #tpu.memory_space<vmem>>, %arg4: memref<1x8x19xf32, #tpu.memory_space<vmem>>, %arg5: memref<1x8x128xf32, #tpu.memory_space<vmem>>, %arg6: memref<1x8x128xf32, #tpu.memory_space<vmem>>, %arg7: memref<1x8x8xf32, #tpu.memory_space<vmem>>, %arg8: memref<8x8xf32, #tpu.memory_space<vmem>>, %arg9: memref<8x1xf32, #tpu.memory_space<vmem>>, %arg10: memref<8x1xf32, #tpu.memory_space<vmem>>, %arg11: memref<8x8xf32, #tpu.memory_space<vmem>>, %arg12: memref<1x8xf32, #tpu.memory_space<vmem>>) attributes {dimension_semantics = [#tpu.dimension_semantics<parallel>, #tpu.dimension_semantics<arbitrary>], iteration_bounds = array<i64: 2, 3>, scalar_prefetch = 1 : i64, scratch_operands = 5 : i64, tpu.core_type = #tpu.core_type<tc>, window_params = [{transform_indices = @transform_0, window_bounds = array<i64: 1, 8, 19>}, {transform_indices = @transform_1, window_bounds = array<i64: 1, 8, 19>}, {transform_indices = @transform_2, window_bounds = array<i64: 1, 8, 128>}, {transform_indices = @transform_3, window_bounds = array<i64: 1, 8, 128>}, {transform_indices = @transform_4, window_bounds = array<i64: 1, 8, 8>}]} {
    %c0_i32 = arith.constant 0 : i32
    %0 = arith.cmpi eq, %arg1, %c0_i32 : i32
    %1 = arith.extui %0 : i1 to i32
    %c0_i32_0 = arith.constant 0 : i32
    %2 = arith.cmpi ne, %1, %c0_i32_0 : i32
    scf.if %2 {
      %cst_39 = arith.constant 0.000000e+00 : f32
      %56 = vector.broadcast %cst_39 : f32 to vector<8x8xf32>
      %c0_40 = arith.constant 0 : index
      %c0_41 = arith.constant 0 : index
      %57 = vector.load %arg8[%c0_40, %c0_41] : memref<8x8xf32, #tpu.memory_space<vmem>>, vector<8x8xf32>
      tpu.vector_store %arg8[%c0_40, %c0_41], %56 {strides = array<i32>} : memref<8x8xf32, #tpu.memory_space<vmem>>, vector<8x8xf32>,
      %cst_42 = arith.constant 0.000000e+00 : f32
      %58 = vector.broadcast %cst_42 : f32 to vector<8x1xf32>
      %c0_43 = arith.constant 0 : index
      %c0_44 = arith.constant 0 : index
      %59 = vector.load %arg9[%c0_43, %c0_44] : memref<8x1xf32, #tpu.memory_space<vmem>>, vector<8x1xf32>
      tpu.vector_store %arg9[%c0_43, %c0_44], %58 {strides = array<i32>} : memref<8x1xf32, #tpu.memory_space<vmem>>, vector<8x1xf32>,
      %cst_45 = arith.constant 0.000000e+00 : f32
      %60 = vector.broadcast %cst_45 : f32 to vector<8x1xf32>
      %c0_46 = arith.constant 0 : index
      %c0_47 = arith.constant 0 : index
      %61 = vector.load %arg10[%c0_46, %c0_47] : memref<8x1xf32, #tpu.memory_space<vmem>>, vector<8x1xf32>
      tpu.vector_store %arg10[%c0_46, %c0_47], %60 {strides = array<i32>} : memref<8x1xf32, #tpu.memory_space<vmem>>, vector<8x1xf32>,
      %cst_48 = arith.constant 0.000000e+00 : f32
      %62 = vector.broadcast %cst_48 : f32 to vector<8x8xf32>
      %c0_49 = arith.constant 0 : index
      %c0_50 = arith.constant 0 : index
      %63 = vector.load %arg11[%c0_49, %c0_50] : memref<8x8xf32, #tpu.memory_space<vmem>>, vector<8x8xf32>
      tpu.vector_store %arg11[%c0_49, %c0_50], %62 {strides = array<i32>} : memref<8x8xf32, #tpu.memory_space<vmem>>, vector<8x8xf32>,
      %cst_51 = arith.constant 0.000000e+00 : f32
      %64 = vector.broadcast %cst_51 : f32 to vector<1x8xf32>
      %c0_52 = arith.constant 0 : index
      %c0_53 = arith.constant 0 : index
      %65 = vector.load %arg12[%c0_52, %c0_53] : memref<1x8xf32, #tpu.memory_space<vmem>>, vector<1x8xf32>
      tpu.vector_store %arg12[%c0_52, %c0_53], %64 {strides = array<i32>} : memref<1x8xf32, #tpu.memory_space<vmem>>, vector<1x8xf32>,
    } else {
    }
    %c0 = arith.constant 0 : index
    %c0_1 = arith.constant 0 : index
    %c0_2 = arith.constant 0 : index
    %3 = vector.load %arg5[%c0, %c0_1, %c0_2] : memref<1x8x128xf32, #tpu.memory_space<vmem>>, vector<1x8x128xf32>
    %4 = vector.shape_cast %3 : vector<1x8x128xf32> to vector<8x128xf32>
    %c0_3 = arith.constant 0 : index
    %c0_4 = arith.constant 0 : index
    %c0_5 = arith.constant 0 : index
    %5 = vector.load %arg6[%c0_3, %c0_4, %c0_5] : memref<1x8x128xf32, #tpu.memory_space<vmem>>, vector<1x8x128xf32>
    %6 = vector.shape_cast %5 : vector<1x8x128xf32> to vector<8x128xf32>
    %7 = math.absf %4 : vector<8x128xf32>
    %cst = arith.constant 0.000000e+00 : f32
    %8 = vector.broadcast %cst : f32 to vector<8x128xf32>
    %9 = arith.subf %8, %7 : vector<8x128xf32>
    %10 = math.exp %9 : vector<8x128xf32>
    %cst_6 = arith.constant 0.000000e+00 : f32
    %11 = vector.broadcast %cst_6 : f32 to vector<8x128xf32>
    %12 = arith.maximumf %4, %11 : vector<8x128xf32>
    %13 = math.log1p %10 : vector<8x128xf32>
    %14 = arith.addf %12, %13 : vector<8x128xf32>
    %cst_7 = arith.constant 0.000000e+00 : f32
    %15 = vector.broadcast %cst_7 : f32 to vector<8x128xf32>
    %16 = arith.cmpf oge, %4, %15 : vector<8x128xf32>
    %cst_8 = arith.constant 1.000000e+00 : f32
    %17 = vector.broadcast %cst_8 : f32 to vector<8x128xf32>
    %18 = arith.addf %17, %10 : vector<8x128xf32>
    %cst_9 = arith.constant 1.000000e+00 : f32
    %19 = vector.broadcast %cst_9 : f32 to vector<8x128xf32>
    %20 = arith.divf %19, %18 : vector<8x128xf32>
    %cst_10 = arith.constant 1.000000e+00 : f32
    %21 = vector.broadcast %cst_10 : f32 to vector<8x128xf32>
    %22 = arith.addf %21, %10 : vector<8x128xf32>
    %23 = arith.divf %10, %22 : vector<8x128xf32>
    %24 = arith.select %16, %20, %23 : vector<8x128xi1>, vector<8x128xf32>
    %25 = arith.truncf %6 : vector<8x128xf32> to vector<8x128xbf16>
    %c0_11 = arith.constant 0 : index
    %c0_12 = arith.constant 0 : index
    %26 = vector.load %arg8[%c0_11, %c0_12] : memref<8x8xf32, #tpu.memory_space<vmem>>, vector<8x8xf32>
    %cst_13 = arith.constant 0.000000e+00 : f32
    %27 = vector.broadcast %cst_13 : f32 to vector<8x128xf32>
    %28 = arith.subf %27, %4 : vector<8x128xf32>
    %29 = arith.truncf %28 : vector<8x128xf32> to vector<8x128xbf16>
    %cst_14 = arith.constant dense<0.000000e+00> : vector<8x8xf32>
    %30 = tpu.matmul %29, %25, %cst_14 {dimension_numbers = #tpu.dot_dimension_numbers<[1], [1], [0], [0], [0, 0, 1, 0], [], []>} : vector<8x128xbf16>, vector<8x128xbf16>, vector<8x8xf32> -> vector<8x8xf32>
    %31 = arith.addf %26, %30 : vector<8x8xf32>
    %c0_15 = arith.constant 0 : index
    %c0_16 = arith.constant 0 : index
    %32 = vector.load %arg8[%c0_15, %c0_16] : memref<8x8xf32, #tpu.memory_space<vmem>>, vector<8x8xf32>
    tpu.vector_store %arg8[%c0_15, %c0_16], %31 {strides = array<i32>} : memref<8x8xf32, #tpu.memory_space<vmem>>, vector<8x8xf32>,
    %c0_17 = arith.constant 0 : index
    %c0_18 = arith.constant 0 : index
    %33 = vector.load %arg11[%c0_17, %c0_18] : memref<8x8xf32, #tpu.memory_space<vmem>>, vector<8x8xf32>
    %34 = arith.truncf %24 : vector<8x128xf32> to vector<8x128xbf16>
    %cst_19 = arith.constant dense<0.000000e+00> : vector<8x8xf32>
    %35 = tpu.matmul %34, %25, %cst_19 {dimension_numbers = #tpu.dot_dimension_numbers<[1], [1], [0], [0], [0, 0, 1, 0], [], []>} : vector<8x128xbf16>, vector<8x128xbf16>, vector<8x8xf32> -> vector<8x8xf32>
    %36 = arith.addf %33, %35 : vector<8x8xf32>
    %c0_20 = arith.constant 0 : index
    %c0_21 = arith.constant 0 : index
    %37 = vector.load %arg11[%c0_20, %c0_21] : memref<8x8xf32, #tpu.memory_space<vmem>>, vector<8x8xf32>
    tpu.vector_store %arg11[%c0_20, %c0_21], %36 {strides = array<i32>} : memref<8x8xf32, #tpu.memory_space<vmem>>, vector<8x8xf32>,
    %cst_22 = arith.constant 1.000000e+00 : bf16
    %38 = vector.broadcast %cst_22 : bf16 to vector<1x128xbf16>
    %c0_23 = arith.constant 0 : index
    %c0_24 = arith.constant 0 : index
    %39 = vector.load %arg12[%c0_23, %c0_24] : memref<1x8xf32, #tpu.memory_space<vmem>>, vector<1x8xf32>
    %cst_25 = arith.constant dense<0.000000e+00> : vector<1x8xf32>
    %40 = tpu.matmul %38, %25, %cst_25 {dimension_numbers = #tpu.dot_dimension_numbers<[1], [1], [0], [0], [0, 0, 1, 0], [], []>} : vector<1x128xbf16>, vector<8x128xbf16>, vector<1x8xf32> -> vector<1x8xf32>
    %41 = arith.addf %39, %40 : vector<1x8xf32>
    %c0_26 = arith.constant 0 : index
    %c0_27 = arith.constant 0 : index
    %42 = vector.load %arg12[%c0_26, %c0_27] : memref<1x8xf32, #tpu.memory_space<vmem>>, vector<1x8xf32>
    tpu.vector_store %arg12[%c0_26, %c0_27], %41 {strides = array<i32>} : memref<1x8xf32, #tpu.memory_space<vmem>>, vector<1x8xf32>,
    %c0_28 = arith.constant 0 : index
    %c0_29 = arith.constant 0 : index
    %43 = vector.load %arg9[%c0_28, %c0_29] : memref<8x1xf32, #tpu.memory_space<vmem>>, vector<8x1xf32>
    %cst_30 = arith.constant dense<0.000000e+00> : vector<8xf32>
    %44 = vector.multi_reduction <add>, %14, %cst_30 [1] : vector<8x128xf32> to vector<8xf32>
    %45 = vector.shape_cast %44 : vector<8xf32> to vector<8x1xf32>
    %46 = arith.addf %43, %45 : vector<8x1xf32>
    %c0_31 = arith.constant 0 : index
    %c0_32 = arith.constant 0 : index
    %47 = vector.load %arg9[%c0_31, %c0_32] : memref<8x1xf32, #tpu.memory_space<vmem>>, vector<8x1xf32>
    tpu.vector_store %arg9[%c0_31, %c0_32], %46 {strides = array<i32>} : memref<8x1xf32, #tpu.memory_space<vmem>>, vector<8x1xf32>,
    %c0_33 = arith.constant 0 : index
    %c0_34 = arith.constant 0 : index
    %48 = vector.load %arg10[%c0_33, %c0_34] : memref<8x1xf32, #tpu.memory_space<vmem>>, vector<8x1xf32>
    %cst_35 = arith.constant dense<0.000000e+00> : vector<8xf32>
    %49 = vector.multi_reduction <add>, %24, %cst_35 [1] : vector<8x128xf32> to vector<8xf32>
    %50 = vector.shape_cast %49 : vector<8xf32> to vector<8x1xf32>
    %51 = arith.addf %48, %50 : vector<8x1xf32>
    %c0_36 = arith.constant 0 : index
    %c0_37 = arith.constant 0 : index
    %52 = vector.load %arg10[%c0_36, %c0_37] : memref<8x1xf32, #tpu.memory_space<vmem>>, vector<8x1xf32>
    tpu.vector_store %arg10[%c0_36, %c0_37], %51 {strides = array<i32>} : memref<8x1xf32, #tpu.memory_space<vmem>>, vector<8x1xf32>,
    %c2_i32 = arith.constant 2 : i32
    %53 = arith.cmpi eq, %arg1, %c2_i32 : i32
    %54 = arith.extui %53 : i1 to i32
    %c0_i32_38 = arith.constant 0 : i32
    %55 = arith.cmpi ne, %54, %c0_i32_38 : i32
    scf.if %55 {
      %56 = arith.index_cast %arg0 : i32 to index
      %57 = memref.load %arg2[%56] : memref<2xi32, #tpu.memory_space<smem>>
      %58 = arith.sitofp %57 : i32 to f32
      %c0_39 = arith.constant 0 : index
      %c0_40 = arith.constant 0 : index
      %c0_41 = arith.constant 0 : index
      %59 = vector.load %arg3[%c0_39, %c0_40, %c0_41] : memref<1x8x19xf32, #tpu.memory_space<vmem>>, vector<1x8x19xf32>
      %60 = vector.shape_cast %59 : vector<1x8x19xf32> to vector<8x19xf32>
      %cst_42 = arith.constant dense<0xFF800000> : vector<8xf32>
      %61 = vector.multi_reduction <maximumf>, %60, %cst_42 [1] : vector<8x19xf32> to vector<8xf32>
      %62 = vector.shape_cast %61 : vector<8xf32> to vector<8x1xf32>
      %63 = vector.broadcast %62 : vector<8x1xf32> to vector<8x19xf32>
      %64 = arith.subf %60, %63 : vector<8x19xf32>
      %65 = math.exp %64 : vector<8x19xf32>
      %cst_43 = arith.constant dense<0.000000e+00> : vector<8xf32>
      %66 = vector.multi_reduction <add>, %65, %cst_43 [1] : vector<8x19xf32> to vector<8xf32>
      %67 = vector.shape_cast %66 : vector<8xf32> to vector<8x1xf32>
      %68 = vector.broadcast %67 : vector<8x1xf32> to vector<8x19xf32>
      %69 = arith.divf %65, %68 : vector<8x19xf32>
      %c0_44 = arith.constant 0 : index
      %c0_45 = arith.constant 0 : index
      %c0_46 = arith.constant 0 : index
      %70 = vector.load %arg4[%c0_44, %c0_45, %c0_46] : memref<1x8x19xf32, #tpu.memory_space<vmem>>, vector<1x8x19xf32>
      %71 = vector.shape_cast %70 : vector<1x8x19xf32> to vector<8x19xf32>
      %cst_47 = arith.constant dense<0.000000e+00> : vector<8x8xf32>
      %72 = tpu.matmul %69, %71, %cst_47 {dimension_numbers = #tpu.dot_dimension_numbers<[1], [1], [0], [0], [0, 0, 1, 0], [], []>} : vector<8x19xf32>, vector<8x19xf32>, vector<8x8xf32> -> vector<8x8xf32>
      %cst_48 = arith.constant 0.000000e+00 : f32
      %73 = vector.broadcast %cst_48 : f32 to vector<8x8xf32>
      %74 = arith.subf %73, %72 : vector<8x8xf32>
      %c0_49 = arith.constant 0 : index
      %c0_50 = arith.constant 0 : index
      %75 = vector.load %arg8[%c0_49, %c0_50] : memref<8x8xf32, #tpu.memory_space<vmem>>, vector<8x8xf32>
      %c0_51 = arith.constant 0 : index
      %c0_52 = arith.constant 0 : index
      %76 = vector.load %arg9[%c0_51, %c0_52] : memref<8x1xf32, #tpu.memory_space<vmem>>, vector<8x1xf32>
      %77 = vector.broadcast %76 : vector<8x1xf32> to vector<8x8xf32>
      %78 = arith.addf %75, %77 : vector<8x8xf32>
      %79 = vector.broadcast %58 : f32 to vector<8x8xf32>
      %80 = arith.divf %78, %79 : vector<8x8xf32>
      %c0_53 = arith.constant 0 : index
      %c0_54 = arith.constant 0 : index
      %81 = vector.load %arg11[%c0_53, %c0_54] : memref<8x8xf32, #tpu.memory_space<vmem>>, vector<8x8xf32>
      %cst_55 = arith.constant 2.000000e+00 : f32
      %82 = vector.broadcast %cst_55 : f32 to vector<8x8xf32>
      %83 = arith.mulf %82, %81 : vector<8x8xf32>
      %cst_56 = arith.constant 1.000000e+00 : f32
      %84 = vector.broadcast %cst_56 : f32 to vector<8x8xf32>
      %85 = arith.addf %83, %84 : vector<8x8xf32>
      %c0_57 = arith.constant 0 : index
      %c0_58 = arith.constant 0 : index
      %86 = vector.load %arg10[%c0_57, %c0_58] : memref<8x1xf32, #tpu.memory_space<vmem>>, vector<8x1xf32>
      %c0_59 = arith.constant 0 : index
      %c0_60 = arith.constant 0 : index
      %87 = vector.load %arg12[%c0_59, %c0_60] : memref<1x8xf32, #tpu.memory_space<vmem>>, vector<1x8xf32>
      %88 = vector.broadcast %86 : vector<8x1xf32> to vector<8x8xf32>
      %89 = vector.broadcast %87 : vector<1x8xf32> to vector<8x8xf32>
      %90 = arith.addf %88, %89 : vector<8x8xf32>
      %cst_61 = arith.constant 1.000000e+00 : f32
      %91 = vector.broadcast %cst_61 : f32 to vector<8x8xf32>
      %92 = arith.addf %90, %91 : vector<8x8xf32>
      %93 = arith.divf %85, %92 : vector<8x8xf32>
      %cst_62 = arith.constant 1.000000e+00 : f32
      %94 = vector.broadcast %cst_62 : f32 to vector<8x8xf32>
      %95 = arith.subf %94, %93 : vector<8x8xf32>
      %cst_63 = arith.constant 1.000000e+00 : f32
      %96 = vector.broadcast %cst_63 : f32 to vector<8x8xf32>
      %97 = arith.mulf %96, %74 : vector<8x8xf32>
      %cst_64 = arith.constant 1.000000e+00 : f32
      %98 = vector.broadcast %cst_64 : f32 to vector<8x8xf32>
      %99 = arith.mulf %98, %80 : vector<8x8xf32>
      %100 = arith.addf %97, %99 : vector<8x8xf32>
      %cst_65 = arith.constant 1.000000e+00 : f32
      %101 = vector.broadcast %cst_65 : f32 to vector<8x8xf32>
      %102 = arith.mulf %101, %95 : vector<8x8xf32>
      %103 = arith.addf %100, %102 : vector<8x8xf32>
      %c0_66 = arith.constant 0 : index
      %c0_67 = arith.constant 0 : index
      %c0_68 = arith.constant 0 : index
      %104 = vector.load %arg7[%c0_66, %c0_67, %c0_68] : memref<1x8x8xf32, #tpu.memory_space<vmem>>, vector<1x8x8xf32>
      %105 = vector.shape_cast %104 : vector<1x8x8xf32> to vector<8x8xf32>
      %106 = vector.shape_cast %103 : vector<8x8xf32> to vector<1x8x8xf32>
      tpu.vector_store %arg7[%c0_66, %c0_67, %c0_68], %106 {strides = array<i32>} : memref<1x8x8xf32, #tpu.memory_space<vmem>>, vector<1x8x8xf32>,
    } else {
    }
    return
  }
  func.func @transform_0(%arg0: i32, %arg1: i32, %arg2: memref<2xi32, #tpu.memory_space<smem>>) -> (i32, i32, i32) {
    %c0_i32 = arith.constant 0 : i32
    %c0_i32_0 = arith.constant 0 : i32
    %c0_i32_1 = arith.constant 0 : i32
    return %arg0, %c0_i32, %c0_i32_0 : i32, i32, i32
  }
  func.func @transform_1(%arg0: i32, %arg1: i32, %arg2: memref<2xi32, #tpu.memory_space<smem>>) -> (i32, i32, i32) {
    %c0_i32 = arith.constant 0 : i32
    %c0_i32_0 = arith.constant 0 : i32
    %c0_i32_1 = arith.constant 0 : i32
    return %arg0, %c0_i32, %c0_i32_0 : i32, i32, i32
  }
  func.func @transform_2(%arg0: i32, %arg1: i32, %arg2: memref<2xi32, #tpu.memory_space<smem>>) -> (i32, i32, i32) {
    %c0_i32 = arith.constant 0 : i32
    %c0_i32_0 = arith.constant 0 : i32
    return %arg0, %c0_i32, %arg1 : i32, i32, i32
  }
  func.func @transform_3(%arg0: i32, %arg1: i32, %arg2: memref<2xi32, #tpu.memory_space<smem>>) -> (i32, i32, i32) {
    %c0_i32 = arith.constant 0 : i32
    %c0_i32_0 = arith.constant 0 : i32
    return %arg0, %c0_i32, %arg1 : i32, i32, i32
  }
  func.func @transform_4(%arg0: i32, %arg1: i32, %arg2: memref<2xi32, #tpu.memory_space<smem>>) -> (i32, i32, i32) {
    %c0_i32 = arith.constant 0 : i32
    %c0_i32_0 = arith.constant 0 : i32
    %c0_i32_1 = arith.constant 0 : i32
    return %arg0, %c0_i32, %c0_i32_0 : i32, i32, i32
  }
}

</mosaic_0001>

<llo_original>
// kernel: tpu_custom_call.1
$region0: #{tpu_custom_call.1}
  #allocation0 [shape = 'u32[]', space=smem, size = 0x4, offset = 0x4, fixed_abs, tag = 'smem constant byte address 0x4 - core index']
  #allocation1 [shape = 'u32[72,128]{1,0:T(1,128)}', space=vmem, size = 0x9000, scoped, tag = 'internal scratch']
  #allocation2 [shape = 'f32[8,8]{1,0:T(8,128)}', space=vmem, size = 0x1000, scoped, tag = 'scratch operand']
  #allocation3 [shape = 'f32[8,1]{1,0:T(8,128)}', space=vmem, size = 0x1000, scoped, tag = 'scratch operand']
  #allocation4 [shape = 'f32[8,1]{1,0:T(8,128)}', space=vmem, size = 0x1000, scoped, tag = 'scratch operand']
  #allocation5 [shape = 'f32[8,8]{1,0:T(8,128)}', space=vmem, size = 0x1000, scoped, tag = 'scratch operand']
  #allocation6 [shape = 'f32[1,8]{1,0:T(1,128)}', space=vmem, size = 0x200, scoped, tag = 'scratch operand']
  #allocation7 [shape = 's32[1]{0}', space=sflag, size = 0x4, scoped, tag = 'scoped memory for tpu_custom_call.1']
  #allocation8 [shape = 'u8[512]{0}', space=smem, size = 0x200, scoped, tag = 'prefetched SMEM operand 0']
  %s0 = inlined_call_operand.hbm [shape: s32[2], index: 0, kind: input, shape index: {}]
  %s1 = inlined_call_operand.hbm [shape: f32[2,8,19], index: 1, kind: input, shape index: {}]
  %s2 = inlined_call_operand.hbm [shape: f32[2,8,19], index: 2, kind: input, shape index: {}]
  %s3 = inlined_call_operand.hbm [shape: f32[2,8,384], index: 3, kind: input, shape index: {}]
  %s4 = inlined_call_operand.hbm [shape: f32[2,8,384], index: 4, kind: input, shape index: {}]
  %s5 = inlined_call_operand.hbm [shape: f32[2,8,8], index: 5, kind: output, shape index: {}]
  %s6 = sld [smem:[#allocation0]]
  $region73: #{tpu_custom_call.1} parent=0
    _
  %s8 = ssub.s32 1, %s6
  %s9 = scalar_select 0, %s8, %s6
  %s11 = sshll.u32 %s0, 4
  %s12 = int_to_ptr.hbm [resolvable:$true] %s11
  %14 = dma.hbm_to_smem %s12, 16, [#allocation8], [#allocation7]
  %16 = dma.done [#allocation7], 16
  %17 = sfence
  $region1: #{tpu_custom_call.1} parent=0
    #allocation9 [shape = 'u8[8192]{0}', space=vmem, size = 0x2000, scoped, tag = 'input window, operand 1']
    #allocation10 [shape = 's32[2]{0}', space=sflag, size = 0x8, scoped, tag = 'scoped memory for tpu_custom_call.1']
    #allocation11 [shape = 's32[2]{0}', space=sflag, size = 0x8, scoped, tag = 'scoped memory for tpu_custom_call.1']
    #allocation12 [shape = 'u8[8192]{0}', space=vmem, size = 0x2000, scoped, tag = 'input window, operand 2']
    #allocation13 [shape = 's32[2]{0}', space=sflag, size = 0x8, scoped, tag = 'scoped memory for tpu_custom_call.1']
    #allocation14 [shape = 'u8[8192]{0}', space=vmem, size = 0x2000, scoped, tag = 'input window, operand 3']
    #allocation15 [shape = 'u8[8192]{0}', space=vmem, size = 0x2000, scoped, tag = 'input window, operand 4']
    #allocation16 [shape = 's32[2]{0}', space=sflag, size = 0x8, scoped, tag = 'scoped memory for tpu_custom_call.1']
    #allocation17 [shape = 'u8[8192]{0}', space=vmem, size = 0x2000, scoped, tag = 'output window, operand 0']
    %18 = vsyncpa [#allocation10], 0
    %s19 = scalar_lea.sflag [#allocation10], 1
    %20 = vsyncpa %s19, 0
    %21 = vsyncpa [#allocation13], 0
    %s22 = scalar_lea.sflag [#allocation13], 1
    %23 = vsyncpa %s22, 0
    %24 = vsyncpa [#allocation16], 0
    %s25 = scalar_lea.sflag [#allocation16], 1
    %26 = vsyncpa %s25, 0
    %27 = vsyncpa [#allocation11], 0
    %s28 = scalar_lea.sflag [#allocation11], 1
    %29 = vsyncpa %s28, 0
    loop: start=0, step=1, limit=8
    $region2: #{tpu_custom_call.1} parent=1 // loop_pre_header
      _
    $region3: #{tpu_custom_call.1} parent=1 // loop_header
      %s31 = sphi 0, %s35
      %p32 = scmp.ge.s32.totalorder %s31, 8
      %s38 = sphi 0, %s50
      %s39 = sphi 0, %s46
      %s40 = sphi 0, %s38
      %s41 = sphi 0, %s39
      %s42 = sphi 0, %s40
      %s43 = sphi 0, %s41
      %s53 = sphi 0, %s55
      %s56 = sphi 0, %s53
      %s57 = sphi 0, %s56
      %s73 = sphi 0, %s57
      %s79 = sphi 0, %s81
      %s82 = sphi 0, %s79
      %s83 = sphi 0, %s82
      %s99 = sphi 0, %s83
      %s107 = sphi 0, %s109
      %s110 = sphi 0, %s107
      %s111 = sphi 0, %s110
      %s127 = sphi 0, %s111
      %s135 = sphi 0, %s137
      %s138 = sphi 0, %s135
      %s139 = sphi 0, %s138
      %s155 = sphi 0, %s139
      %s161 = sphi 0, %s163
      %s164 = sphi 0, %s161
      %s165 = sphi 0, %s164
      %s181 = sphi 0, %s165
    $region4: #{tpu_custom_call.1} parent=1 // loop_header_branch
      %34 = sbr.rel (%p32) target = $region8
    $region5: #{tpu_custom_call.1} parent=1 // loop_body
      %s36 = ssub.s32 %s31, 1
      %s37 = ssub.s32 %s31, 2
      %s44 = sadd.s32 1, %s39
      %p45 = scmp.ge.s32.totalorder %s44, 3
      %s46 = scalar_select %p45, 0, %s44
      %s47 = sadd.s32 1, %s38
      %s48 = scalar_select %p45, %s47, %s38
      %p49 = scmp.ge.s32.totalorder %s48, 2
      %s50 = scalar_select %p49, 0, %s48
      %s51 = ssub.s32 %s38, %s50
      %p52 = scmp.eq.s32.totalorder %s51, 0
      %s54 = sadd.s32 %s53, 1
      %s55 = scalar_select %p52, %s53, %s54
      %p58 = pneg %p52
      %p59 = scmp.eq.s32.totalorder %s31, 5
      %p60 = por %p58, %p59
      %p61 = scmp.ne.s32.totalorder %s53, %s56
      %p62 = scmp.eq.s32.totalorder %s31, 0
      %p63 = por %p61, %p62
      %p64 = scmp.ne.s32.totalorder %s53, %s56
      %p65 = scmp.eq.s32.totalorder %s36, 5
      %p66 = por %p64, %p65
      %p67 = scmp.ne.s32.totalorder %s56, %s57
      %p68 = scmp.eq.s32.totalorder %s36, 0
      %p69 = por %p67, %p68
      %p70 = scmp.ne.s32.totalorder %s56, %s57
      %p71 = scmp.eq.s32.totalorder %s37, 5
      %p72 = por %p70, %p71
      %p74 = scmp.ne.s32.totalorder %s57, %s73
      %p75 = scmp.eq.s32.totalorder %s37, 0
      %p76 = por %p74, %p75
      %s77 = ssub.s32 %s38, %s50
      %p78 = scmp.eq.s32.totalorder %s77, 0
      %s80 = sadd.s32 %s79, 1
      %s81 = scalar_select %p78, %s79, %s80
      %p84 = pneg %p78
      %p85 = scmp.eq.s32.totalorder %s31, 5
      %p86 = por %p84, %p85
      %p87 = scmp.ne.s32.totalorder %s79, %s82
      %p88 = scmp.eq.s32.totalorder %s31, 0
      %p89 = por %p87, %p88
      %p90 = scmp.ne.s32.totalorder %s79, %s82
      %p91 = scmp.eq.s32.totalorder %s36, 5
      %p92 = por %p90, %p91
      %p93 = scmp.ne.s32.totalorder %s82, %s83
      %p94 = scmp.eq.s32.totalorder %s36, 0
      %p95 = por %p93, %p94
      %p96 = scmp.ne.s32.totalorder %s82, %s83
      %p97 = scmp.eq.s32.totalorder %s37, 5
      %p98 = por %p96, %p97
      %p100 = scmp.ne.s32.totalorder %s83, %s99
      %p101 = scmp.eq.s32.totalorder %s37, 0
      %p102 = por %p100, %p101
      %s103 = ssub.s32 %s38, %s50
      %s104 = ssub.s32 %s39, %s46
      %s105 = sor.u32 %s103, %s104
      %p106 = scmp.eq.s32.totalorder %s105, 0
      %s108 = sadd.s32 %s107, 1
      %s109 = scalar_select %p106, %s107, %s108
      %p112 = pneg %p106
      %p113 = scmp.eq.s32.totalorder %s31, 5
      %p114 = por %p112, %p113
      %p115 = scmp.ne.s32.totalorder %s107, %s110
      %p116 = scmp.eq.s32.totalorder %s31, 0
      %p117 = por %p115, %p116
      %p118 = scmp.ne.s32.totalorder %s107, %s110
      %p119 = scmp.eq.s32.totalorder %s36, 5
      %p120 = por %p118, %p119
      %p121 = scmp.ne.s32.totalorder %s110, %s111
      %p122 = scmp.eq.s32.totalorder %s36, 0
      %p123 = por %p121, %p122
      %p124 = scmp.ne.s32.totalorder %s110, %s111
      %p125 = scmp.eq.s32.totalorder %s37, 5
      %p126 = por %p124, %p125
      %p128 = scmp.ne.s32.totalorder %s111, %s127
      %p129 = scmp.eq.s32.totalorder %s37, 0
      %p130 = por %p128, %p129
      %s131 = ssub.s32 %s38, %s50
      %s132 = ssub.s32 %s39, %s46
      %s133 = sor.u32 %s131, %s132
      %p134 = scmp.eq.s32.totalorder %s133, 0
      %s136 = sadd.s32 %s135, 1
      %s137 = scalar_select %p134, %s135, %s136
      %p140 = pneg %p134
      %p141 = scmp.eq.s32.totalorder %s31, 5
      %p142 = por %p140, %p141
      %p143 = scmp.ne.s32.totalorder %s135, %s138
      %p144 = scmp.eq.s32.totalorder %s31, 0
      %p145 = por %p143, %p144
      %p146 = scmp.ne.s32.totalorder %s135, %s138
      %p147 = scmp.eq.s32.totalorder %s36, 5
      %p148 = por %p146, %p147
      %p149 = scmp.ne.s32.totalorder %s138, %s139
      %p150 = scmp.eq.s32.totalorder %s36, 0
      %p151 = por %p149, %p150
      %p152 = scmp.ne.s32.totalorder %s138, %s139
      %p153 = scmp.eq.s32.totalorder %s37, 5
      %p154 = por %p152, %p153
      %p156 = scmp.ne.s32.totalorder %s139, %s155
      %p157 = scmp.eq.s32.totalorder %s37, 0
      %p158 = por %p156, %p157
      %s159 = ssub.s32 %s38, %s50
      %p160 = scmp.eq.s32.totalorder %s159, 0
      %s162 = sadd.s32 %s161, 1
      %s163 = scalar_select %p160, %s161, %s162
      %p166 = pneg %p160
      %p167 = scmp.eq.s32.totalorder %s31, 5
      %p168 = por %p166, %p167
      %p169 = scmp.ne.s32.totalorder %s161, %s164
      %p170 = scmp.eq.s32.totalorder %s31, 0
      %p171 = por %p169, %p170
      %p172 = scmp.ne.s32.totalorder %s161, %s164
      %p173 = scmp.eq.s32.totalorder %s36, 5
      %p174 = por %p172, %p173
      %p175 = scmp.ne.s32.totalorder %s164, %s165
      %p176 = scmp.eq.s32.totalorder %s36, 0
      %p177 = por %p175, %p176
      %p178 = scmp.ne.s32.totalorder %s164, %s165
      %p179 = scmp.eq.s32.totalorder %s37, 5
      %p180 = por %p178, %p179
      %p182 = scmp.ne.s32.totalorder %s165, %s181
      %p183 = scmp.eq.s32.totalorder %s37, 0
      %p184 = por %p182, %p183
      %p185 = scmp.le.s32.totalorder 1, %s31
      %p186 = scmp.lt.s32.totalorder %s31, 7
      %p187 = pnand %p185, %p186
      %p188 = pneg %p187
      // Predicated region
      $region9: #{tpu_custom_call.1} parent=5 // pred_check
        _
      $region10: #{tpu_custom_call.1} parent=5 // pred_check_branch
        %190 = sbr.rel (%p187) target = $region12
      $region11: #{tpu_custom_call.1} parent=5 // pred_region
        %s191 = ssub.s32 %s31, 1
      $region12: #{tpu_custom_call.1} parent=5 // pred_fallthru
        _
      %p192 = scmp.lt.s32.totalorder %s31, 6
      // Predicated region
      $region13: #{tpu_custom_call.1} parent=5 // pred_check
        %p193 = pneg %p192
      $region14: #{tpu_custom_call.1} parent=5 // pred_check_branch
        %195 = sbr.rel (%p193) target = $region16
      $region15: #{tpu_custom_call.1} parent=5 // pred_region
        // Predicated region
        $region17: #{tpu_custom_call.1} parent=15 // pred_check
          %p196 = pneg %p63
        $region18: #{tpu_custom_call.1} parent=15 // pred_check_branch
          %198 = sbr.rel (%p196) target = $region20
        $region19: #{tpu_custom_call.1} parent=15 // pred_region
          %s199 = sand.u32 %s53, 1
          %s200 = scalar_lea.sflag [#allocation10], %s199
          %s201 = sand.u32 %s53, 1
          %s202 = smul.addr %s201, 8
          %s203 = scalar_lea.vmem [#allocation9], %s202
          %205 = vsyncadd %s200, 0
          %s206 = smul.addr %s38, 8
          %s207 = scalar_lea.hbm %s1, %s206
          %s209 = sshll.u32 %s207, 4
          %s210 = int_to_ptr.hbm [resolvable:$true] %s209
          %s211 = sshll.u32 %s203, 4
          %s212 = int_to_ptr.vmem [resolvable:$true] %s211
          %214 = dma.hbm_to_vmem [thread:$0]  %s210, 128, %s212, %s200
        $region20: #{tpu_custom_call.1} parent=15 // pred_fallthru
          _
        // Predicated region
        $region21: #{tpu_custom_call.1} parent=15 // pred_check
          %p215 = pneg %p89
        $region22: #{tpu_custom_call.1} parent=15 // pred_check_branch
          %217 = sbr.rel (%p215) target = $region24
        $region23: #{tpu_custom_call.1} parent=15 // pred_region
          %s218 = sand.u32 %s31, 1
          %s219 = scalar_lea.sflag [#allocation13], %s218
          %s220 = sand.u32 %s79, 1
          %s221 = smul.addr %s220, 8
          %s222 = scalar_lea.vmem [#allocation12], %s221
          %224 = vsyncadd %s219, 0
          %s225 = smul.addr %s38, 8
          %s226 = scalar_lea.hbm %s2, %s225
          %s228 = sshll.u32 %s226, 4
          %s229 = int_to_ptr.hbm [resolvable:$true] %s228
          %s230 = sshll.u32 %s222, 4
          %s231 = int_to_ptr.vmem [resolvable:$true] %s230
          %233 = dma.hbm_to_vmem [thread:$0]  %s229, 128, %s231, %s219
        $region24: #{tpu_custom_call.1} parent=15 // pred_fallthru
          _
        // Predicated region
        $region25: #{tpu_custom_call.1} parent=15 // pred_check
          %p234 = pneg %p117
        $region26: #{tpu_custom_call.1} parent=15 // pred_check_branch
          %236 = sbr.rel (%p234) target = $region28
        $region27: #{tpu_custom_call.1} parent=15 // pred_region
          %s237 = sand.u32 %s31, 1
          %s238 = scalar_lea.sflag [#allocation13], %s237
          %s239 = sand.u32 %s107, 1
          %s240 = smul.addr %s239, 8
          %s241 = scalar_lea.vmem [#allocation14], %s240
          %243 = vsyncadd %s238, 0
          %s244 = smul.addr %s38, 3
          %s245 = sadd.s32 %s39, %s244
          %s246 = smul.addr %s245, 8
          %s247 = scalar_lea.hbm %s3, %s246
          %s249 = sshll.u32 %s247, 4
          %s250 = int_to_ptr.hbm [resolvable:$true] %s249
          %s251 = sshll.u32 %s241, 4
          %s252 = int_to_ptr.vmem [resolvable:$true] %s251
          %254 = dma.hbm_to_vmem [thread:$0]  %s250, 128, %s252, %s238
        $region28: #{tpu_custom_call.1} parent=15 // pred_fallthru
          _
        // Predicated region
        $region29: #{tpu_custom_call.1} parent=15 // pred_check
          %p255 = pneg %p145
        $region30: #{tpu_custom_call.1} parent=15 // pred_check_branch
          %257 = sbr.rel (%p255) target = $region32
        $region31: #{tpu_custom_call.1} parent=15 // pred_region
          %s258 = sand.u32 %s135, 1
          %s259 = scalar_lea.sflag [#allocation16], %s258
          %s260 = sand.u32 %s135, 1
          %s261 = smul.addr %s260, 8
          %s262 = scalar_lea.vmem [#allocation15], %s261
          %264 = vsyncadd %s259, 0
          %s265 = smul.addr %s38, 3
          %s266 = sadd.s32 %s39, %s265
          %s267 = smul.addr %s266, 8
          %s268 = scalar_lea.hbm %s4, %s267
          %s270 = sshll.u32 %s268, 4
          %s271 = int_to_ptr.hbm [resolvable:$true] %s270
          %s272 = sshll.u32 %s262, 4
          %s273 = int_to_ptr.vmem [resolvable:$true] %s272
          %275 = dma.hbm_to_vmem [thread:$0]  %s271, 128, %s273, %s259
        $region32: #{tpu_custom_call.1} parent=15 // pred_fallthru
          _
      $region16: #{tpu_custom_call.1} parent=5 // pred_fallthru
        _
      %p276 = scmp.le.s32.totalorder 1, %s31
      %p277 = scmp.lt.s32.totalorder %s31, 7
      %p278 = pnand %p276, %p277
      %p279 = pneg %p278
      // Predicated region
      $region33: #{tpu_custom_call.1} parent=5 // pred_check
        _
      $region34: #{tpu_custom_call.1} parent=5 // pred_check_branch
        %281 = sbr.rel (%p278) target = $region36
      $region35: #{tpu_custom_call.1} parent=5 // pred_region
        %s282 = ssub.s32 %s31, 1
        %s283 = sand.u32 %s56, 1
        %s284 = scalar_lea.sflag [#allocation10], %s283
        %s285 = sand.u32 %s56, 1
        %s286 = smul.addr %s285, 8
        %s287 = scalar_lea.vmem [#allocation9], %s286
        // Predicated region
        $region37: #{tpu_custom_call.1} parent=35 // pred_check
          %p288 = pneg %p69
        $region38: #{tpu_custom_call.1} parent=35 // pred_check_branch
          %290 = sbr.rel (%p288) target = $region40
        $region39: #{tpu_custom_call.1} parent=35 // pred_region
          %292 = dma.done %s284, 128
        $region40: #{tpu_custom_call.1} parent=35 // pred_fallthru
          _
        %s293 = sand.u32 %s36, 1
        %s294 = scalar_lea.sflag [#allocation13], %s293
        %s295 = sand.u32 %s82, 1
        %s296 = smul.addr %s295, 8
        %s297 = scalar_lea.vmem [#allocation12], %s296
        // Predicated region
        $region41: #{tpu_custom_call.1} parent=35 // pred_check
          %p298 = pneg %p95
        $region42: #{tpu_custom_call.1} parent=35 // pred_check_branch
          %300 = sbr.rel (%p298) target = $region44
        $region43: #{tpu_custom_call.1} parent=35 // pred_region
          %302 = dma.done %s294, 128
        $region44: #{tpu_custom_call.1} parent=35 // pred_fallthru
          _
        %s303 = sand.u32 %s36, 1
        %s304 = scalar_lea.sflag [#allocation13], %s303
        %s305 = sand.u32 %s110, 1
        %s306 = smul.addr %s305, 8
        %s307 = scalar_lea.vmem [#allocation14], %s306
        // Predicated region
        $region45: #{tpu_custom_call.1} parent=35 // pred_check
          %p308 = pneg %p123
        $region46: #{tpu_custom_call.1} parent=35 // pred_check_branch
          %310 = sbr.rel (%p308) target = $region48
        $region47: #{tpu_custom_call.1} parent=35 // pred_region
          %312 = dma.done %s304, 128
        $region48: #{tpu_custom_call.1} parent=35 // pred_fallthru
          _
        %s313 = sand.u32 %s138, 1
        %s314 = scalar_lea.sflag [#allocation16], %s313
        %s315 = sand.u32 %s138, 1
        %s316 = smul.addr %s315, 8
        %s317 = scalar_lea.vmem [#allocation15], %s316
        // Predicated region
        $region49: #{tpu_custom_call.1} parent=35 // pred_check
          %p318 = pneg %p151
        $region50: #{tpu_custom_call.1} parent=35 // pred_check_branch
          %320 = sbr.rel (%p318) target = $region52
        $region51: #{tpu_custom_call.1} parent=35 // pred_region
          %322 = dma.done %s314, 128
        $region52: #{tpu_custom_call.1} parent=35 // pred_fallthru
          _
        %s323 = sand.u32 %s56, 1
        %s324 = scalar_lea.sflag [#allocation10], %s323
        %s325 = sand.u32 %s56, 1
        %s326 = smul.addr %s325, 8
        %s327 = scalar_lea.vmem [#allocation9], %s326
        %p328 = pneg %p69
        %p329 = pneg %p66
        %s330 = sand.u32 %s36, 1
        %s331 = scalar_lea.sflag [#allocation13], %s330
        %s332 = sand.u32 %s82, 1
        %s333 = smul.addr %s332, 8
        %s334 = scalar_lea.vmem [#allocation12], %s333
        %p335 = pneg %p95
        %p336 = pneg %p92
        %s337 = sand.u32 %s36, 1
        %s338 = scalar_lea.sflag [#allocation13], %s337
        %s339 = sand.u32 %s110, 1
        %s340 = smul.addr %s339, 8
        %s341 = scalar_lea.vmem [#allocation14], %s340
        %p342 = pneg %p123
        %p343 = pneg %p120
        %s344 = sand.u32 %s138, 1
        %s345 = scalar_lea.sflag [#allocation16], %s344
        %s346 = sand.u32 %s138, 1
        %s347 = smul.addr %s346, 8
        %s348 = scalar_lea.vmem [#allocation15], %s347
        %p349 = pneg %p151
        %p350 = pneg %p148
        %p351 = pneg %p177
        %p352 = pneg %p174
        %s353 = sand.u32 %s164, 1
        %s354 = scalar_lea.sflag [#allocation11], %s353
        %s355 = sand.u32 %s164, 1
        %s356 = smul.addr %s355, 8
        %s357 = scalar_lea.vmem [#allocation17], %s356
        %p360 = scmp.eq.s32.totalorder %s41, 0
        // Predicated region
        $region53: #{tpu_custom_call.1} parent=35 // pred_check
          %p361 = pneg %p360
        $region54: #{tpu_custom_call.1} parent=35 // pred_check_branch
          %363 = sbr.rel (%p361) target = $region56
        $region55: #{tpu_custom_call.1} parent=35 // pred_region
          %vm364 = vcmask 64512
          %365 = vst.msk [vmem:[#allocation2] sm:$0xff] %vm364, 0.0
          %vm366 = vcmask 7168
          %367 = vst.msk [vmem:[#allocation3] sm:$0xff] %vm366, 0.0
          %368 = vst.msk [vmem:[#allocation4] sm:$0xff] %vm366, 0.0
          %369 = vst.msk [vmem:[#allocation5] sm:$0xff] %vm364, 0.0
          %vm370 = vcmask 57344
          %371 = vst.msk [vmem:[#allocation6] sm:$0x1] %vm370, 0.0
        $region56: #{tpu_custom_call.1} parent=35 // pred_fallthru
          _
        %v372 = vld [vmem:[%s307] sm:$0xff]
        %v373 = vld [vmem:[%s317] sm:$0xff]
        %v374 = vand.u32 2147483647, %v372
        %v375 = vsub.f32 0.0, %v374
        %v376 = vmul.f32 %v375, 1.442695
        %v377 = vpow.pop %v376
        %v378 = vmax.f32 %v372, 0.0
        %v379 = vadd.f32 %v377, 1.0
        %v380 = vlog2.pop %v379
        %v381 = vmul.f32 %v380, 0.6931472
        %v382 = vmul.f32 -0.5, %v377
        %v383 = vadd.f32 %v382, 1.0
        %v384 = vmul.f32 %v383, %v377
        %v385 = vand.u32 2147483647, %v377
        %vm386 = vcmp.lt.f32.partialorder %v385, 0.0004427343
        %v387 = vsel %vm386, %v384, %v381
        %v388 = vadd.f32 %v378, %v387
        %vm389 = vcmp.ge.f32.partialorder %v372, 0.0
        %v390 = vadd.f32 %v377, 1.0
        %v391 = vrcp.pop %v390
        %v392 = vmul.f32 %v390, %v391
        %v393 = vsub.f32 1.0, %v392
        %v394 = vmul.f32 %v391, %v393
        %v395 = vadd.f32 %v391, %v394
        %vm396 = vweird.f32 %v390
        %vm397 = vweird.f32 %v391
        %vm398 = vmor %vm396, %vm397
        %v399 = vsel %vm398, %v391, %v395
        %v400 = vand.u32 2147483647, %v390
        %vm401 = vcmp.eq.f32.partialorder %v400, 8.507059e+37
        %v402 = vand.u32 %v390, 2147483648
        %v403 = vor.u32 1.1754944e-38, %v402
        %v404 = vsel %vm401, %v403, %v399
        %v405 = vmul.f32 1.0, %v404
        %v406 = vmul.f32 %v377, %v404
        %v407 = vsel %vm389, %v405, %v406
        %v408 = vpack.c.bf16 %v373, %v373
        %v409 = vld [vmem:[#allocation2] sm:$0xff]
        %v410 = vsub.f32 0.0, %v372
        %v411 = vpack.c.bf16 %v410, %v410
        %412 = vmatpush.bf16.xpose.msra.mxu0 0
        %413 = vmatpush.bf16.xpose.msra.mxu0 0
        %414 = vmatpush.bf16.xpose.msra.mxu0 0
        %415 = vmatpush.bf16.xpose.msra.mxu0 0
        %416 = vmatpush.bf16.xpose.msra.mxu0 0
        %417 = vmatpush.bf16.xpose.msra.mxu0 0
        %418 = vmatpush.bf16.xpose.msra.mxu0 0
        %419 = vmatpush.bf16.xpose.msra.mxu0 %v408
        %420 = vmatmul.bf16.gmra.mxu0 %v411
        %v421 = vpop.f32.mrf.mxu0
        %v422 = vadd.f32 0.0, %v421
        %v423 = vpop.f32.mrf.mxu0
        %424 = vdwg.mxu0
        %v425 = vadd.f32 %v409, %v422
        %vm426 = vcmask 64512
        %427 = vst.msk [vmem:[#allocation2] sm:$0xff] %vm426, %v425
        %v428 = vld [vmem:[#allocation5] sm:$0xff]
        %v429 = vpack.c.bf16 %v407, %v407
        %430 = vmatpush.bf16.xpose.msra.mxu0 0
        %431 = vmatpush.bf16.xpose.msra.mxu0 0
        %432 = vmatpush.bf16.xpose.msra.mxu0 0
        %433 = vmatpush.bf16.xpose.msra.mxu0 0
        %434 = vmatpush.bf16.xpose.msra.mxu0 0
        %435 = vmatpush.bf16.xpose.msra.mxu0 0
        %436 = vmatpush.bf16.xpose.msra.mxu0 0
        %437 = vmatpush.bf16.xpose.msra.mxu0 %v408
        %438 = vmatmul.bf16.gmra.mxu0 %v429
        %v439 = vpop.f32.mrf.mxu0
        %v440 = vadd.f32 0.0, %v439
        %v441 = vpop.f32.mrf.mxu0
        %442 = vdwg.mxu0
        %v443 = vadd.f32 %v428, %v440
        %444 = vst.msk [vmem:[#allocation5] sm:$0xff] %vm426, %v443
        %v445 = vld [vmem:[#allocation6] sm:$0x1]
        %446 = vmatpush.bf16.xpose.msra.mxu0 0
        %447 = vmatpush.bf16.xpose.msra.mxu0 0
        %448 = vmatpush.bf16.xpose.msra.mxu0 0
        %449 = vmatpush.bf16.xpose.msra.mxu0 0
        %450 = vmatpush.bf16.xpose.msra.mxu0 0
        %451 = vmatpush.bf16.xpose.msra.mxu0 0
        %452 = vmatpush.bf16.xpose.msra.mxu0 0
        %453 = vmatpush.bf16.xpose.msra.mxu0 %v408
        %454 = vmatmul.bf16.gmra.mxu0 1065369472
        %v455 = vpop.f32.mrf.mxu0
        %v456 = vadd.f32 0.0, %v455
        %v457 = vpop.f32.mrf.mxu0
        %458 = vdwg.mxu0
        %v459 = vadd.f32 %v445, %v456
        %vm460 = vcmask 57344
        %461 = vst.msk [vmem:[#allocation6] sm:$0x1] %vm460, %v459
        %v462 = vld [vmem:[#allocation3] sm:$0xff]
        %463 = vadd.xlane.f32.xlu0 %v388
        %v464 = vpop.xlane.xlu0 %463
        %v465 = vadd.f32 %v462, %v464
        %vm466 = vcmask 7168
        %467 = vst.msk [vmem:[#allocation3] sm:$0xff] %vm466, %v465
        %v468 = vld [vmem:[#allocation4] sm:$0xff]
        %469 = vadd.xlane.f32.xlu0 %v407
        %v470 = vpop.xlane.xlu0 %469
        %v471 = vadd.f32 %v468, %v470
        %472 = vst.msk [vmem:[#allocation4] sm:$0xff] %vm466, %v471
        %p473 = scmp.eq.s32.totalorder %s41, 2
        // Predicated region
        $region57: #{tpu_custom_call.1} parent=35 // pred_check
          %p474 = pneg %p473
        $region58: #{tpu_custom_call.1} parent=35 // pred_check_branch
          %476 = sbr.rel (%p474) target = $region60
        $region59: #{tpu_custom_call.1} parent=35 // pred_region
          %s477 = sld [smem:[#allocation8 + %s40]]
          %s478 = scvt.s32.f32 %s477
          %v479 = vld [vmem:[%s287] sm:$0xff]
          %vm480 = vcmask 154624
          %v481 = vsel %vm480, %v479, -inf
          %482 = vmax.xlane.f32.xlu0 %v481
          %v483 = vpop.xlane.xlu0 %482
          %v484 = vsub.f32 %v479, %v483
          %v485 = vmul.f32 %v484, 1.442695
          %v486 = vpow.pop %v485
          %v487 = vsel %vm480, %v486, 0.0
          %488 = vadd.xlane.f32.xlu0 %v487
          %v489 = vpop.xlane.xlu0 %488
          %v490 = vrcp.pop %v489
          %v491 = vmul.f32 %v489, %v490
          %v492 = vsub.f32 1.0, %v491
          %v493 = vmul.f32 %v490, %v492
          %v494 = vadd.f32 %v490, %v493
          %vm495 = vweird.f32 %v489
          %vm496 = vweird.f32 %v490
          %vm497 = vmor %vm495, %vm496
          %v498 = vsel %vm497, %v490, %v494
          %v499 = vand.u32 2147483647, %v489
          %vm500 = vcmp.eq.f32.partialorder %v499, 8.507059e+37
          %v501 = vand.u32 %v489, 2147483648
          %v502 = vor.u32 1.1754944e-38, %v501
          %v503 = vsel %vm500, %v502, %v498
          %v504 = vmul.f32 %v486, %v503
          %v505 = vld [vmem:[%s297] sm:$0xff]
          %v507 = vsel %vm480, %v504, 0
          %v510 = vsel %vm480, %v505, 0
          %512 = vmatpush.xpose.msra.mxu0 0.0
          %513 = vmatpush.xpose.msra.mxu0 0.0
          %514 = vmatpush.xpose.msra.mxu0 0.0
          %515 = vmatpush.xpose.msra.mxu0 0.0
          %516 = vmatpush.xpose.msra.mxu0 0.0
          %517 = vmatpush.xpose.msra.mxu0 0.0
          %518 = vmatpush.xpose.msra.mxu0 0.0
          %519 = vmatpush.xpose.msra.mxu0 0.0
          %520 = vmatpush.xpose.msra.mxu0 0.0
          %521 = vmatpush.xpose.msra.mxu0 0.0
          %522 = vmatpush.xpose.msra.mxu0 0.0
          %523 = vmatpush.xpose.msra.mxu0 0.0
          %524 = vmatpush.xpose.msra.mxu0 0.0
          %525 = vmatpush.xpose.msra.mxu0 0.0
          %526 = vmatpush.xpose.msra.mxu0 0.0
          %527 = vmatpush.xpose.msra.mxu0 %v510
          %528 = vmatmul.f32.gmra.mxu0 %v507
          %v529 = vpop.f32.mrf.mxu0
          %v530 = vadd.f32 0.0, %v529
          %531 = vdwg.mxu0
          %v532 = vsub.f32 0.0, %v530
          %v533 = vld [vmem:[#allocation2] sm:$0xff]
          %v534 = vld [vmem:[#allocation3] sm:$0xff]
          %536 = vset.pattern.permute.xlu0 0
          %537 = vperm.xlu0 %536, %v534
          %v538 = vpop.permute.xlu0 %537
          %v540 = vadd.f32 %v533, %v538
          %v541 = vstv %s478
          %v542 = vrcp.pop %v541
          %v543 = vmul.f32 %v541, %v542
          %v544 = vsub.f32 1.0, %v543
          %v545 = vmul.f32 %v542, %v544
          %v546 = vadd.f32 %v542, %v545
          %vm547 = vweird.f32 %v541
          %vm548 = vweird.f32 %v542
          %vm549 = vmor %vm547, %vm548
          %v550 = vsel %vm549, %v542, %v546
          %v551 = vand.u32 2147483647, %v541
          %vm552 = vcmp.eq.f32.partialorder %v551, 8.507059e+37
          %v553 = vand.u32 %v541, 2147483648
          %v554 = vor.u32 1.1754944e-38, %v553
          %v555 = vsel %vm552, %v554, %v550
          %v556 = vmul.f32 %v540, %v555
          %v557 = vld [vmem:[#allocation5] sm:$0xff]
          %v558 = vmul.f32 %v557, 2.0
          %v559 = vadd.f32 %v558, 1.0
          %v560 = vld [vmem:[#allocation4] sm:$0xff]
          %v561 = vld [vmem:[#allocation6] sm:$0x1]
          %563 = vset.pattern.permute.xlu0 0
          %564 = vperm.xlu0 %563, %v560
          %v565 = vpop.permute.xlu0 %564
          %v568 = vperm.slane %v561, 0
          %v570 = vadd.f32 %v565, %v568
          %v571 = vadd.f32 %v570, 1.0
          %v572 = vrcp.pop %v571
          %v573 = vmul.f32 %v571, %v572
          %v574 = vsub.f32 1.0, %v573
          %v575 = vmul.f32 %v572, %v574
          %v576 = vadd.f32 %v572, %v575
          %vm577 = vweird.f32 %v571
          %vm578 = vweird.f32 %v572
          %vm579 = vmor %vm577, %vm578
          %v580 = vsel %vm579, %v572, %v576
          %v581 = vand.u32 2147483647, %v571
          %vm582 = vcmp.eq.f32.partialorder %v581, 8.507059e+37
          %v583 = vand.u32 %v571, 2147483648
          %v584 = vor.u32 1.1754944e-38, %v583
          %v585 = vsel %vm582, %v584, %v580
          %v586 = vmul.f32 %v559, %v585
          %v587 = vsub.f32 1.0, %v586
          %v588 = vadd.f32 %v532, %v556
          %v589 = vadd.f32 %v588, %v587
          %590 = vst.msk [vmem:[%s357] sm:$0xff] %vm426, %v589
        $region60: #{tpu_custom_call.1} parent=35 // pred_fallthru
          _
        %s591 = sand.u32 %s164, 1
        %s592 = scalar_lea.sflag [#allocation11], %s591
        %s593 = sand.u32 %s164, 1
        %s594 = smul.addr %s593, 8
        %s595 = scalar_lea.vmem [#allocation17], %s594
        // Predicated region
        $region61: #{tpu_custom_call.1} parent=35 // pred_check
          %p596 = pneg %p174
        $region62: #{tpu_custom_call.1} parent=35 // pred_check_branch
          %598 = sbr.rel (%p596) target = $region64
        $region63: #{tpu_custom_call.1} parent=35 // pred_region
          %600 = vsyncadd %s592, 0
          %s601 = smul.addr %s40, 8
          %s602 = scalar_lea.hbm %s5, %s601
          %s604 = sshll.u32 %s595, 4
          %s605 = int_to_ptr.vmem [resolvable:$true] %s604
          %s606 = sshll.u32 %s602, 4
          %s607 = int_to_ptr.hbm [resolvable:$true] %s606
          %609 = dma.vmem_to_hbm [thread:$0]  %s605, 128, %s607, %s592
        $region64: #{tpu_custom_call.1} parent=35 // pred_fallthru
          _
      $region36: #{tpu_custom_call.1} parent=5 // pred_fallthru
        _
      %p610 = scmp.le.s32.totalorder 2, %s31
      // Predicated region
      $region65: #{tpu_custom_call.1} parent=5 // pred_check
        %p611 = pneg %p610
      $region66: #{tpu_custom_call.1} parent=5 // pred_check_branch
        %613 = sbr.rel (%p611) target = $region68
      $region67: #{tpu_custom_call.1} parent=5 // pred_region
        %s614 = ssub.s32 %s31, 2
        // Predicated region
        $region69: #{tpu_custom_call.1} parent=67 // pred_check
          %p615 = pneg %p180
        $region70: #{tpu_custom_call.1} parent=67 // pred_check_branch
          %617 = sbr.rel (%p615) target = $region72
        $region71: #{tpu_custom_call.1} parent=67 // pred_region
          %s618 = sand.u32 %s165, 1
          %s619 = scalar_lea.sflag [#allocation11], %s618
          %s620 = sand.u32 %s165, 1
          %s621 = smul.addr %s620, 8
          %s622 = scalar_lea.vmem [#allocation17], %s621
          %624 = dma.done %s619, 128
        $region72: #{tpu_custom_call.1} parent=67 // pred_fallthru
          _
      $region68: #{tpu_custom_call.1} parent=5 // pred_fallthru
        _
    $region6: #{tpu_custom_call.1} parent=1 // loop_footer
      %s35 = sadd.s32 1, %s31
    $region7: #{tpu_custom_call.1} parent=1 // loop_footer_branch
      %30 = sbr.rel target = $region3
    $region8: #{tpu_custom_call.1} parent=1 // loop_exit
      _
    %625 = vsyncpa [#allocation10], 1
    %s626 = scalar_lea.sflag [#allocation10], 1
    %627 = vsyncpa %s626, 1
    %628 = vsyncpa [#allocation13], 1
    %s629 = scalar_lea.sflag [#allocation13], 1
    %630 = vsyncpa %s629, 1
    %631 = vsyncpa [#allocation16], 1
    %s632 = scalar_lea.sflag [#allocation16], 1
    %633 = vsyncpa %s632, 1
    %634 = vsyncpa [#allocation11], 1
    %s635 = scalar_lea.sflag [#allocation11], 1
    %636 = vsyncpa %s635, 1

</llo_original>
